<compile_context>
chip_gen: v6e
topology: v6e:2x2x1
jax: 0.10.0
libtpu: 0.0.40
codegen_flags: <defaults>
</compile_context>

<pallas_src>
import functools

import jax
import jax.numpy as jnp
from jax import lax
from jax.experimental import pallas as pl
from jax.experimental.pallas import tpu as pltpu

_LANES = 128


def _dice_sums_kernel(yp_ref, yt_ref, bpm_ref, top_ref, bot_ref, *,
                      tile_s, rem, grid_s_half, grid_s_total, unroll):
    """Accumulates per-row lane-wide partial sums of yt*yp*bpm and (yt+yp)*bpm."""
    p_id = pl.program_id(0)
    s_id = pl.program_id(2)

    # Reset the resident accumulators at the start of every (split, row) sweep.
    @pl.when(s_id == 0)
    def _():
        top_ref[...] = jnp.zeros_like(top_ref)
        bot_ref[...] = jnp.zeros_like(bot_ref)

    rows = top_ref.shape[0]
    # Global S-block index of this step.
    g = p_id * grid_s_half + s_id

    def _chunk(c, carry):
        t, b = carry
        off = pl.multiple_of(c * _LANES, _LANES)
        yp = yp_ref[:, pl.ds(off, _LANES)].astype(jnp.float32)
        yt = yt_ref[:, pl.ds(off, _LANES)].astype(jnp.float32)
        bp = bpm_ref[:, pl.ds(off, _LANES)].astype(jnp.float32)
        return t + yt * yp * bp, b + (yt + yp) * bp

    def _run(n_full, masked_tail):
        # Vreg-resident (rows, 128) partials; one VMEM acc update per grid step.
        t = jnp.zeros((rows, _LANES), jnp.float32)
        b = jnp.zeros((rows, _LANES), jnp.float32)
        if n_full > 0:
            t, b = lax.fori_loop(0, n_full, _chunk, (t, b),
                                 unroll=max(1, min(unroll, n_full)))
        if masked_tail:
            # Single boundary chunk: mask the products so NaN/Inf garbage from
            # the clamped DMA of the partial last block cannot leak via x * 0.
            off = pl.multiple_of(n_full * _LANES, _LANES)
            yp = yp_ref[:, pl.ds(off, _LANES)].astype(jnp.float32)
            yt = yt_ref[:, pl.ds(off, _LANES)].astype(jnp.float32)
            bp = bpm_ref[:, pl.ds(off, _LANES)].astype(jnp.float32)
            lane = lax.broadcasted_iota(jnp.int32, (rows, _LANES), 1)
            valid = lane < (rem - n_full * _LANES)
            t = t + jnp.where(valid, yt * yp * bp, 0.0)
            b = b + jnp.where(valid, (yt + yp) * bp, 0.0)
        top_ref[...] += t
        bot_ref[...] += b

    n_chunks = tile_s // _LANES
    if rem == 0:
        # All real S blocks are full; skip the (at most one) phantom step of
        # the second split half.
        @pl.when(g < grid_s_total)
        def _():
            _run(n_chunks, False)
    else:
        last = grid_s_total - 1

        @pl.when(g < last)
        def _():
            _run(n_chunks, False)

        @pl.when(g == last)
        def _():
            _run(rem // _LANES, (rem % _LANES) != 0)


def _vmem_budgets():
    """Per-generation VMEM sizing: (pipeline buffer budget, scoped vmem limit)."""
    cap = 64 * 1024 * 1024  # conservative default = v7x physical VMEM
    try:
        info = pltpu.get_tpu_info()
        cap = int(getattr(info, "vmem_capacity_bytes", cap))
    except Exception:
        pass
    # ~70% of physical VMEM for double-buffered input blocks, ~80% scoped limit
    # (-> ~44 / 51 MiB on v7x, ~90 / 102 MiB on v5e/v6e).
    return (cap * 7) // 10, (cap * 8) // 10


def _dice_partial_sums(y_pred, y_true, bpm):
    """Returns (sum(yt*yp*bpm, spatial), sum((yt+yp)*bpm, spatial)), each [B, C]."""
    B, C = y_pred.shape[:2]
    S = 1
    for d in y_pred.shape[2:]:
        S *= d
    R = B * C

    # Free metadata reshape (contiguous NC...-major) -- no extra HBM pass.
    yp = y_pred.reshape(R, S)
    yt = y_true.reshape(R, S)
    bp = bpm.reshape(R, S)
    itemsize = jnp.dtype(yp.dtype).itemsize

    buffer_budget, vmem_limit = _vmem_budgets()

    # Row blocking: multiple of the sublane packing (8 f32 / 16 bf16) unless it
    # covers the full R extent.  Capped at 64 so the two (r_blk, 128) f32
    # accumulators stay within the 64-entry vreg file (16 vregs total).
    sublane = max(8, 32 // max(1, itemsize))
    if R % sublane == 0:
        r_blk = min(R, 64)
    else:
        r_blk = R  # rare for dice (R = B*C is small); tolerates spills if huge.
    grid_r = pl.cdiv(R, r_blk)

    # S tiling: target multi-MiB input blocks (HBM streaming; ~0.35us/step fixed
    # cost), bounded by the per-gen VMEM budget for 3 inputs x 2 pipeline
    # buffers, and by half of S so the split axis always has 2 real halves.
    s_blocks = pl.cdiv(S, _LANES)
    per_block_cap = min(4 * 1024 * 1024, buffer_budget // (3 * 2))
    tile_s = (per_block_cap // (r_blk * itemsize)) // _LANES * _LANES
    if s_blocks >= 2:
        tile_s = min(tile_s, pl.cdiv(s_blocks, 2) * _LANES)
    tile_s = max(_LANES, min(tile_s, s_blocks * _LANES))

    grid_s_total = pl.cdiv(S, tile_s)
    rem = S % tile_s  # ragged tail handled in-kernel (no jnp.pad of inputs)
    n_split = 2 if grid_s_total >= 2 else 1
    grid_s_half = pl.cdiv(grid_s_total, n_split)

    kernel = functools.partial(
        _dice_sums_kernel, tile_s=tile_s, rem=rem,
        grid_s_half=grid_s_half, grid_s_total=grid_s_total, unroll=8)

    def in_map(p, r, s):
        # Clamp the (at most one) phantom step of the second half; its
        # contribution is skipped inside the kernel via pl.when.
        return (r, jnp.minimum(p * grid_s_half + s, grid_s_total - 1))

    in_spec = pl.BlockSpec((r_blk, tile_s), in_map)
    out_spec = pl.BlockSpec((None, r_blk, _LANES), lambda p, r, s: (p, r, 0))

    cost = pl.CostEstimate(
        flops=5 * R * S,
        transcendentals=0,
        bytes_accessed=3 * itemsize * R * S + 2 * 4 * n_split * R * _LANES,
    )

    top_lanes, bot_lanes = pl.pallas_call(
        kernel,
        out_shape=(
            jax.ShapeDtypeStruct((n_split, R, _LANES), jnp.float32),
            jax.ShapeDtypeStruct((n_split, R, _LANES), jnp.float32),
        ),
        grid_spec=pltpu.PrefetchScalarGridSpec(
            num_scalar_prefetch=0,
            grid=(n_split, grid_r, grid_s_half),
            in_specs=[in_spec, in_spec, in_spec],
            out_specs=(out_spec, out_spec),
        ),
        compiler_params=pltpu.CompilerParams(
            dimension_semantics=("parallel", "parallel", "arbitrary"),
            vmem_limit_bytes=int(vmem_limit),
        ),
        cost_estimate=cost,
    )(yp, yt, bp)

    # Tiny epilogue: sum the split halves and the 128 lanes (O(2*R*128)).
    top = jnp.sum(top_lanes, axis=(0, 2)).reshape(B, C)
    bot = jnp.sum(bot_lanes, axis=(0, 2)).reshape(B, C)
    return top, bot


@jax.jit
def dice_bpm(y_pred, y_true, bpm):
    """Pallas equivalent of Dice_bpm.forward:
    -mean(2*sum(yt*yp*bpm) / clamp(sum((yt+yp)*bpm), min=1e-5))."""
    top_sum, bot_sum = _dice_partial_sums(y_pred, y_true, bpm)
    top = 2.0 * top_sum
    bottom = jnp.maximum(bot_sum, 1e-5)
    dice = jnp.mean(top / bottom)
    return -dice


def _reference(y_pred, y_true, bpm):
    vol_axes = tuple(range(2, y_pred.ndim))
    top = 2.0 * jnp.sum(y_true * y_pred * bpm, axis=vol_axes)
    bottom = jnp.maximum(jnp.sum((y_true + y_pred) * bpm, axis=vol_axes), 1e-5)
    return -jnp.mean(top / bottom)


if __name__ == "__main__":
    key = jax.random.PRNGKey(0)
    k1, k2, k3 = jax.random.split(key, 3)

    B, C, H, W = 2, 4, 16, 16  # NCHW, ndims=2 -> spatial reduce over (H, W)
    y_pred = jax.nn.sigmoid(jax.random.normal(k1, (B, C, H, W), dtype=jnp.float32))
    y_true = (jax.random.uniform(k2, (B, C, H, W)) > 0.5).astype(jnp.float32)
    bpm = jax.random.uniform(k3, (B, C, H, W), dtype=jnp.float32)

    out = dice_bpm(y_pred, y_true, bpm)
    out = jax.block_until_ready(out)

    ref = _reference(y_pred, y_true, bpm)
    assert jnp.allclose(out, ref, rtol=1e-5, atol=1e-6), (out, ref)

    print("KERNEL_OK")
</pallas_src>

<mosaic_0001>
module attributes {stable_mosaic.version = 11 : i64} {
  func.func @_dice_sums_kernel(%arg0: i32, %arg1: i32, %arg2: i32, %arg3: memref<8x128xf32, #tpu.memory_space<vmem>>, %arg4: memref<8x128xf32, #tpu.memory_space<vmem>>, %arg5: memref<8x128xf32, #tpu.memory_space<vmem>>, %arg6: memref<1x8x128xf32, #tpu.memory_space<vmem>>, %arg7: memref<1x8x128xf32, #tpu.memory_space<vmem>>) attributes {dimension_semantics = [#tpu.dimension_semantics<parallel>, #tpu.dimension_semantics<parallel>, #tpu.dimension_semantics<arbitrary>], iteration_bounds = array<i64: 2, 1, 1>, scalar_prefetch = 0 : i64, scratch_operands = 0 : i64, tpu.core_type = #tpu.core_type<tc>, window_params = [{transform_indices = @transform_0, window_bounds = array<i64: 8, 128>}, {transform_indices = @transform_1, window_bounds = array<i64: 8, 128>}, {transform_indices = @transform_2, window_bounds = array<i64: 8, 128>}, {transform_indices = @transform_3, window_bounds = array<i64: 1, 8, 128>}, {transform_indices = @transform_4, window_bounds = array<i64: 1, 8, 128>}]} {
    %c0_i32 = arith.constant 0 : i32
    %0 = arith.cmpi eq, %arg2, %c0_i32 : i32
    %1 = arith.extui %0 : i1 to i32
    %c0_i32_0 = arith.constant 0 : i32
    %2 = arith.cmpi ne, %1, %c0_i32_0 : i32
    scf.if %2 {
      %cst = arith.constant 0.000000e+00 : f32
      %8 = vector.broadcast %cst : f32 to vector<8x128xf32>
      %c0 = arith.constant 0 : index
      %c0_2 = arith.constant 0 : index
      %c0_3 = arith.constant 0 : index
      %9 = vector.load %arg6[%c0, %c0_2, %c0_3] : memref<1x8x128xf32, #tpu.memory_space<vmem>>, vector<1x8x128xf32>
      %10 = vector.shape_cast %9 : vector<1x8x128xf32> to vector<8x128xf32>
      %11 = vector.shape_cast %8 : vector<8x128xf32> to vector<1x8x128xf32>
      tpu.vector_store %arg6[%c0, %c0_2, %c0_3], %11 {strides = array<i32>} : memref<1x8x128xf32, #tpu.memory_space<vmem>>, vector<1x8x128xf32>,
      %cst_4 = arith.constant 0.000000e+00 : f32
      %12 = vector.broadcast %cst_4 : f32 to vector<8x128xf32>
      %c0_5 = arith.constant 0 : index
      %c0_6 = arith.constant 0 : index
      %c0_7 = arith.constant 0 : index
      %13 = vector.load %arg7[%c0_5, %c0_6, %c0_7] : memref<1x8x128xf32, #tpu.memory_space<vmem>>, vector<1x8x128xf32>
      %14 = vector.shape_cast %13 : vector<1x8x128xf32> to vector<8x128xf32>
      %15 = vector.shape_cast %12 : vector<8x128xf32> to vector<1x8x128xf32>
      tpu.vector_store %arg7[%c0_5, %c0_6, %c0_7], %15 {strides = array<i32>} : memref<1x8x128xf32, #tpu.memory_space<vmem>>, vector<1x8x128xf32>,
    } else {
    }
    %c1_i32 = arith.constant 1 : i32
    %3 = arith.muli %arg0, %c1_i32 : i32
    %4 = arith.addi %3, %arg2 : i32
    %c2_i32 = arith.constant 2 : i32
    %5 = arith.cmpi slt, %4, %c2_i32 : i32
    %6 = arith.extui %5 : i1 to i32
    %c0_i32_1 = arith.constant 0 : i32
    %7 = arith.cmpi ne, %6, %c0_i32_1 : i32
    scf.if %7 {
      %cst = arith.constant 0.000000e+00 : f32
      %8 = vector.broadcast %cst : f32 to vector<8x128xf32>
      %cst_2 = arith.constant 0.000000e+00 : f32
      %9 = vector.broadcast %cst_2 : f32 to vector<8x128xf32>
      %c0_i32_3 = arith.constant 0 : i32
      %c128_i32 = arith.constant 128 : i32
      %10 = arith.muli %c0_i32_3, %c128_i32 : i32
      %11 = tpu.assume_multiple %10, 128 : i32
      %c0 = arith.constant 0 : index
      %12 = arith.index_cast %11 : i32 to index
      %13 = vector.load %arg3[%c0, %12] : memref<8x128xf32, #tpu.memory_space<vmem>>, vector<8x128xf32>
      %c0_4 = arith.constant 0 : index
      %14 = arith.index_cast %11 : i32 to index
      %15 = vector.load %arg4[%c0_4, %14] : memref<8x128xf32, #tpu.memory_space<vmem>>, vector<8x128xf32>
      %c0_5 = arith.constant 0 : index
      %16 = arith.index_cast %11 : i32 to index
      %17 = vector.load %arg5[%c0_5, %16] : memref<8x128xf32, #tpu.memory_space<vmem>>, vector<8x128xf32>
      %18 = arith.mulf %15, %13 : vector<8x128xf32>
      %19 = arith.mulf %18, %17 : vector<8x128xf32>
      %20 = arith.addf %8, %19 : vector<8x128xf32>
      %21 = arith.addf %15, %13 : vector<8x128xf32>
      %22 = arith.mulf %21, %17 : vector<8x128xf32>
      %23 = arith.addf %9, %22 : vector<8x128xf32>
      %c1_i32_6 = arith.constant 1 : i32
      %c0_7 = arith.constant 0 : index
      %c0_8 = arith.constant 0 : index
      %c0_9 = arith.constant 0 : index
      %24 = vector.load %arg6[%c0_7, %c0_8, %c0_9] : memref<1x8x128xf32, #tpu.memory_space<vmem>>, vector<1x8x128xf32>
      %25 = vector.shape_cast %24 : vector<1x8x128xf32> to vector<8x128xf32>
      %26 = arith.addf %25, %20 : vector<8x128xf32>
      %c0_10 = arith.constant 0 : index
      %c0_11 = arith.constant 0 : index
      %c0_12 = arith.constant 0 : index
      %27 = vector.load %arg6[%c0_10, %c0_11, %c0_12] : memref<1x8x128xf32, #tpu.memory_space<vmem>>, vector<1x8x128xf32>
      %28 = vector.shape_cast %27 : vector<1x8x128xf32> to vector<8x128xf32>
      %29 = vector.shape_cast %26 : vector<8x128xf32> to vector<1x8x128xf32>
      tpu.vector_store %arg6[%c0_10, %c0_11, %c0_12], %29 {strides = array<i32>} : memref<1x8x128xf32, #tpu.memory_space<vmem>>, vector<1x8x128xf32>,
      %c0_13 = arith.constant 0 : index
      %c0_14 = arith.constant 0 : index
      %c0_15 = arith.constant 0 : index
      %30 = vector.load %arg7[%c0_13, %c0_14, %c0_15] : memref<1x8x128xf32, #tpu.memory_space<vmem>>, vector<1x8x128xf32>
      %31 = vector.shape_cast %30 : vector<1x8x128xf32> to vector<8x128xf32>
      %32 = arith.addf %31, %23 : vector<8x128xf32>
      %c0_16 = arith.constant 0 : index
      %c0_17 = arith.constant 0 : index
      %c0_18 = arith.constant 0 : index
      %33 = vector.load %arg7[%c0_16, %c0_17, %c0_18] : memref<1x8x128xf32, #tpu.memory_space<vmem>>, vector<1x8x128xf32>
      %34 = vector.shape_cast %33 : vector<1x8x128xf32> to vector<8x128xf32>
      %35 = vector.shape_cast %32 : vector<8x128xf32> to vector<1x8x128xf32>
      tpu.vector_store %arg7[%c0_16, %c0_17, %c0_18], %35 {strides = array<i32>} : memref<1x8x128xf32, #tpu.memory_space<vmem>>, vector<1x8x128xf32>,
    } else {
    }
    return
  }
  func.func @transform_0(%arg0: i32, %arg1: i32, %arg2: i32) -> (i32, i32) {
    %c1_i32 = arith.constant 1 : i32
    %0 = arith.muli %arg0, %c1_i32 : i32
    %1 = arith.addi %0, %arg2 : i32
    %c1_i32_0 = arith.constant 1 : i32
    %2 = arith.minsi %1, %c1_i32_0 : i32
    %c0_i32 = arith.constant 0 : i32
    return %arg1, %2 : i32, i32
  }
  func.func @transform_1(%arg0: i32, %arg1: i32, %arg2: i32) -> (i32, i32) {
    %c1_i32 = arith.constant 1 : i32
    %0 = arith.muli %arg0, %c1_i32 : i32
    %1 = arith.addi %0, %arg2 : i32
    %c1_i32_0 = arith.constant 1 : i32
    %2 = arith.minsi %1, %c1_i32_0 : i32
    %c0_i32 = arith.constant 0 : i32
    return %arg1, %2 : i32, i32
  }
  func.func @transform_2(%arg0: i32, %arg1: i32, %arg2: i32) -> (i32, i32) {
    %c1_i32 = arith.constant 1 : i32
    %0 = arith.muli %arg0, %c1_i32 : i32
    %1 = arith.addi %0, %arg2 : i32
    %c1_i32_0 = arith.constant 1 : i32
    %2 = arith.minsi %1, %c1_i32_0 : i32
    %c0_i32 = arith.constant 0 : i32
    return %arg1, %2 : i32, i32
  }
  func.func @transform_3(%arg0: i32, %arg1: i32, %arg2: i32) -> (i32, i32, i32) {
    %c0_i32 = arith.constant 0 : i32
    %c0_i32_0 = arith.constant 0 : i32
    return %arg0, %arg1, %c0_i32 : i32, i32, i32
  }
  func.func @transform_4(%arg0: i32, %arg1: i32, %arg2: i32) -> (i32, i32, i32) {
    %c0_i32 = arith.constant 0 : i32
    %c0_i32_0 = arith.constant 0 : i32
    return %arg0, %arg1, %c0_i32 : i32, i32, i32
  }
}

</mosaic_0001>

<llo_original>
// kernel: dice_bpm.1
$region0: #{dice_bpm.1}
  #allocation0 [shape = 'u32[]', space=smem, size = 0x4, offset = 0x4, fixed_abs, tag = 'smem constant byte address 0x4 - core index']
  #allocation1 [shape = 'u32[144,128]{1,0:T(1,128)}', space=vmem, size = 0x12000, scoped, tag = 'internal scratch']
  %s0 = inlined_call_operand.vmem [shape: f32[8,256], index: 0, kind: input, shape index: {}]
  %s1 = inlined_call_operand.vmem [shape: f32[8,256], index: 1, kind: input, shape index: {}]
  %s2 = inlined_call_operand.vmem [shape: f32[8,256], index: 2, kind: input, shape index: {}]
  %s3 = inlined_call_operand.vmem [shape: f32[2,8,128], index: 3, kind: output, shape index: {0}]
  %s4 = inlined_call_operand.vmem [shape: f32[2,8,128], index: 4, kind: output, shape index: {1}]
  %5 = xla_tuple %s3, %s4
  %s6 = sld [smem:[#allocation0]]
  $region61: #{dice_bpm.1} parent=0
    _
  %s8 = ssub.s32 1, %s6
  %s9 = scalar_select 0, %s8, %s6
  loop: start=0, step=1, limit=4
  $region2: #{dice_bpm.1} parent=0 // loop_pre_header
    _
  $region3: #{dice_bpm.1} parent=0 // loop_header
    %s11 = sphi 0, %s15
    %p12 = scmp.ge.s32.totalorder %s11, 4
    %s18 = sphi 0, %s37
    %s19 = sphi 0, %s33
    %s20 = sphi 0, %s29
    %s21 = sphi 0, %s18
    %s22 = sphi 0, %s19
    %s23 = sphi 0, %s20
    %s24 = sphi 0, %s21
    %s25 = sphi 0, %s22
    %s26 = sphi 0, %s23
    %s48 = sphi 0, %s50
    %s51 = sphi 0, %s48
    %s52 = sphi 0, %s51
    %s68 = sphi 0, %s52
    %s82 = sphi 0, %s84
    %s85 = sphi 0, %s82
    %s86 = sphi 0, %s85
    %s102 = sphi 0, %s86
    %s116 = sphi 0, %s118
    %s119 = sphi 0, %s116
    %s120 = sphi 0, %s119
    %s136 = sphi 0, %s120
    %s144 = sphi 0, %s146
    %s147 = sphi 0, %s144
    %s148 = sphi 0, %s147
    %s164 = sphi 0, %s148
    %s172 = sphi 0, %s174
    %s175 = sphi 0, %s172
    %s176 = sphi 0, %s175
    %s192 = sphi 0, %s176
  $region4: #{dice_bpm.1} parent=0 // loop_header_branch
    %14 = sbr.rel (%p12) target = $region8
  $region5: #{dice_bpm.1} parent=0 // loop_body
    %s16 = ssub.s32 %s11, 1
    %s17 = ssub.s32 %s11, 2
    %s27 = sadd.s32 1, %s20
    %p28 = scmp.ge.s32.totalorder %s27, 1
    %s29 = scalar_select %p28, 0, %s27
    %s30 = sadd.s32 1, %s19
    %s31 = scalar_select %p28, %s30, %s19
    %p32 = scmp.ge.s32.totalorder %s31, 1
    %s33 = scalar_select %p32, 0, %s31
    %s34 = sadd.s32 1, %s18
    %s35 = scalar_select %p32, %s34, %s18
    %p36 = scmp.ge.s32.totalorder %s35, 2
    %s37 = scalar_select %p36, 0, %s35
    %s38 = sadd.s32 %s18, %s20
    %p39 = scmp.lt.s32.totalorder %s38, 1
    %s40 = scalar_select %p39, %s38, 1
    %s41 = sadd.s32 %s37, %s29
    %p42 = scmp.lt.s32.totalorder %s41, 1
    %s43 = scalar_select %p42, %s41, 1
    %s44 = ssub.s32 %s19, %s33
    %s45 = ssub.s32 %s40, %s43
    %s46 = sor.u32 %s44, %s45
    %p47 = scmp.eq.s32.totalorder %s46, 0
    %s49 = sadd.s32 %s48, 1
    %s50 = scalar_select %p47, %s48, %s49
    %p53 = pneg %p47
    %p54 = scmp.eq.s32.totalorder %s11, 1
    %p55 = por %p53, %p54
    %p56 = scmp.ne.s32.totalorder %s48, %s51
    %p57 = scmp.eq.s32.totalorder %s11, 0
    %p58 = por %p56, %p57
    %p59 = scmp.ne.s32.totalorder %s48, %s51
    %p60 = scmp.eq.s32.totalorder %s16, 1
    %p61 = por %p59, %p60
    %p62 = scmp.ne.s32.totalorder %s51, %s52
    %p63 = scmp.eq.s32.totalorder %s16, 0
    %p64 = por %p62, %p63
    %p65 = scmp.ne.s32.totalorder %s51, %s52
    %p66 = scmp.eq.s32.totalorder %s17, 1
    %p67 = por %p65, %p66
    %p69 = scmp.ne.s32.totalorder %s52, %s68
    %p70 = scmp.eq.s32.totalorder %s17, 0
    %p71 = por %p69, %p70
    %s72 = sadd.s32 %s18, %s20
    %p73 = scmp.lt.s32.totalorder %s72, 1
    %s74 = scalar_select %p73, %s72, 1
    %s75 = sadd.s32 %s37, %s29
    %p76 = scmp.lt.s32.totalorder %s75, 1
    %s77 = scalar_select %p76, %s75, 1
    %s78 = ssub.s32 %s19, %s33
    %s79 = ssub.s32 %s74, %s77
    %s80 = sor.u32 %s78, %s79
    %p81 = scmp.eq.s32.totalorder %s80, 0
    %s83 = sadd.s32 %s82, 1
    %s84 = scalar_select %p81, %s82, %s83
    %p87 = pneg %p81
    %p88 = scmp.eq.s32.totalorder %s11, 1
    %p89 = por %p87, %p88
    %p90 = scmp.ne.s32.totalorder %s82, %s85
    %p91 = scmp.eq.s32.totalorder %s11, 0
    %p92 = por %p90, %p91
    %p93 = scmp.ne.s32.totalorder %s82, %s85
    %p94 = scmp.eq.s32.totalorder %s16, 1
    %p95 = por %p93, %p94
    %p96 = scmp.ne.s32.totalorder %s85, %s86
    %p97 = scmp.eq.s32.totalorder %s16, 0
    %p98 = por %p96, %p97
    %p99 = scmp.ne.s32.totalorder %s85, %s86
    %p100 = scmp.eq.s32.totalorder %s17, 1
    %p101 = por %p99, %p100
    %p103 = scmp.ne.s32.totalorder %s86, %s102
    %p104 = scmp.eq.s32.totalorder %s17, 0
    %p105 = por %p103, %p104
    %s106 = sadd.s32 %s18, %s20
    %p107 = scmp.lt.s32.totalorder %s106, 1
    %s108 = scalar_select %p107, %s106, 1
    %s109 = sadd.s32 %s37, %s29
    %p110 = scmp.lt.s32.totalorder %s109, 1
    %s111 = scalar_select %p110, %s109, 1
    %s112 = ssub.s32 %s19, %s33
    %s113 = ssub.s32 %s108, %s111
    %s114 = sor.u32 %s112, %s113
    %p115 = scmp.eq.s32.totalorder %s114, 0
    %s117 = sadd.s32 %s116, 1
    %s118 = scalar_select %p115, %s116, %s117
    %p121 = pneg %p115
    %p122 = scmp.eq.s32.totalorder %s11, 1
    %p123 = por %p121, %p122
    %p124 = scmp.ne.s32.totalorder %s116, %s119
    %p125 = scmp.eq.s32.totalorder %s11, 0
    %p126 = por %p124, %p125
    %p127 = scmp.ne.s32.totalorder %s116, %s119
    %p128 = scmp.eq.s32.totalorder %s16, 1
    %p129 = por %p127, %p128
    %p130 = scmp.ne.s32.totalorder %s119, %s120
    %p131 = scmp.eq.s32.totalorder %s16, 0
    %p132 = por %p130, %p131
    %p133 = scmp.ne.s32.totalorder %s119, %s120
    %p134 = scmp.eq.s32.totalorder %s17, 1
    %p135 = por %p133, %p134
    %p137 = scmp.ne.s32.totalorder %s120, %s136
    %p138 = scmp.eq.s32.totalorder %s17, 0
    %p139 = por %p137, %p138
    %s140 = ssub.s32 %s18, %s37
    %s141 = ssub.s32 %s19, %s33
    %s142 = sor.u32 %s140, %s141
    %p143 = scmp.eq.s32.totalorder %s142, 0
    %s145 = sadd.s32 %s144, 1
    %s146 = scalar_select %p143, %s144, %s145
    %p149 = pneg %p143
    %p150 = scmp.eq.s32.totalorder %s11, 1
    %p151 = por %p149, %p150
    %p152 = scmp.ne.s32.totalorder %s144, %s147
    %p153 = scmp.eq.s32.totalorder %s11, 0
    %p154 = por %p152, %p153
    %p155 = scmp.ne.s32.totalorder %s144, %s147
    %p156 = scmp.eq.s32.totalorder %s16, 1
    %p157 = por %p155, %p156
    %p158 = scmp.ne.s32.totalorder %s147, %s148
    %p159 = scmp.eq.s32.totalorder %s16, 0
    %p160 = por %p158, %p159
    %p161 = scmp.ne.s32.totalorder %s147, %s148
    %p162 = scmp.eq.s32.totalorder %s17, 1
    %p163 = por %p161, %p162
    %p165 = scmp.ne.s32.totalorder %s148, %s164
    %p166 = scmp.eq.s32.totalorder %s17, 0
    %p167 = por %p165, %p166
    %s168 = ssub.s32 %s18, %s37
    %s169 = ssub.s32 %s19, %s33
    %s170 = sor.u32 %s168, %s169
    %p171 = scmp.eq.s32.totalorder %s170, 0
    %s173 = sadd.s32 %s172, 1
    %s174 = scalar_select %p171, %s172, %s173
    %p177 = pneg %p171
    %p178 = scmp.eq.s32.totalorder %s11, 1
    %p179 = por %p177, %p178
    %p180 = scmp.ne.s32.totalorder %s172, %s175
    %p181 = scmp.eq.s32.totalorder %s11, 0
    %p182 = por %p180, %p181
    %p183 = scmp.ne.s32.totalorder %s172, %s175
    %p184 = scmp.eq.s32.totalorder %s16, 1
    %p185 = por %p183, %p184
    %p186 = scmp.ne.s32.totalorder %s175, %s176
    %p187 = scmp.eq.s32.totalorder %s16, 0
    %p188 = por %p186, %p187
    %p189 = scmp.ne.s32.totalorder %s175, %s176
    %p190 = scmp.eq.s32.totalorder %s17, 1
    %p191 = por %p189, %p190
    %p193 = scmp.ne.s32.totalorder %s176, %s192
    %p194 = scmp.eq.s32.totalorder %s17, 0
    %p195 = por %p193, %p194
    %p196 = scmp.le.s32.totalorder 1, %s11
    %p197 = scmp.lt.s32.totalorder %s11, 3
    %p198 = pnand %p196, %p197
    %p199 = pneg %p198
    // Predicated region
    $region9: #{dice_bpm.1} parent=5 // pred_check
      _
    $region10: #{dice_bpm.1} parent=5 // pred_check_branch
      %201 = sbr.rel (%p198) target = $region12
    $region11: #{dice_bpm.1} parent=5 // pred_region
      %s202 = ssub.s32 %s11, 1
    $region12: #{dice_bpm.1} parent=5 // pred_fallthru
      _
    %p203 = scmp.lt.s32.totalorder %s11, 2
    // Predicated region
    $region13: #{dice_bpm.1} parent=5 // pred_check
      %p204 = pneg %p203
    $region14: #{dice_bpm.1} parent=5 // pred_check_branch
      %206 = sbr.rel (%p204) target = $region16
    $region15: #{dice_bpm.1} parent=5 // pred_region
      // Predicated region
      $region17: #{dice_bpm.1} parent=15 // pred_check
        %p207 = pneg %p58
      $region18: #{dice_bpm.1} parent=15 // pred_check_branch
        %209 = sbr.rel (%p207) target = $region20
      $region19: #{dice_bpm.1} parent=15 // pred_region
        %s210 = sadd.s32 %s18, %s20
        %p211 = scmp.lt.s32.totalorder %s210, 1
        %s212 = scalar_select %p211, %s210, 1
        %p213 = scmp.lt.s32.totalorder %s19, 0
        %s214 = scalar_select %p213, %s19, 0
        %p215 = scmp.lt.s32.totalorder %s212, 1
        %s216 = scalar_select %p215, %s212, 1
        %s217 = smul.addr %s214, 2
        %s218 = sadd.s32 %s216, %s217
        %s219 = smul.addr %s218, 8
        %s220 = scalar_lea.vmem %s0, %s219
        %s221 = sadd.s32 %s18, %s20
        %p222 = scmp.lt.s32.totalorder %s221, 1
        %s223 = scalar_select %p222, %s221, 1
      $region20: #{dice_bpm.1} parent=15 // pred_fallthru
        _
      // Predicated region
      $region21: #{dice_bpm.1} parent=15 // pred_check
        %p224 = pneg %p92
      $region22: #{dice_bpm.1} parent=15 // pred_check_branch
        %226 = sbr.rel (%p224) target = $region24
      $region23: #{dice_bpm.1} parent=15 // pred_region
        %s227 = sadd.s32 %s18, %s20
        %p228 = scmp.lt.s32.totalorder %s227, 1
        %s229 = scalar_select %p228, %s227, 1
        %p230 = scmp.lt.s32.totalorder %s19, 0
        %s231 = scalar_select %p230, %s19, 0
        %p232 = scmp.lt.s32.totalorder %s229, 1
        %s233 = scalar_select %p232, %s229, 1
        %s234 = smul.addr %s231, 2
        %s235 = sadd.s32 %s233, %s234
        %s236 = smul.addr %s235, 8
        %s237 = scalar_lea.vmem %s1, %s236
        %s238 = sadd.s32 %s18, %s20
        %p239 = scmp.lt.s32.totalorder %s238, 1
        %s240 = scalar_select %p239, %s238, 1
      $region24: #{dice_bpm.1} parent=15 // pred_fallthru
        _
      // Predicated region
      $region25: #{dice_bpm.1} parent=15 // pred_check
        %p241 = pneg %p126
      $region26: #{dice_bpm.1} parent=15 // pred_check_branch
        %243 = sbr.rel (%p241) target = $region28
      $region27: #{dice_bpm.1} parent=15 // pred_region
        %s244 = sadd.s32 %s18, %s20
        %p245 = scmp.lt.s32.totalorder %s244, 1
        %s246 = scalar_select %p245, %s244, 1
        %p247 = scmp.lt.s32.totalorder %s19, 0
        %s248 = scalar_select %p247, %s19, 0
        %p249 = scmp.lt.s32.totalorder %s246, 1
        %s250 = scalar_select %p249, %s246, 1
        %s251 = smul.addr %s248, 2
        %s252 = sadd.s32 %s250, %s251
        %s253 = smul.addr %s252, 8
        %s254 = scalar_lea.vmem %s2, %s253
        %s255 = sadd.s32 %s18, %s20
        %p256 = scmp.lt.s32.totalorder %s255, 1
        %s257 = scalar_select %p256, %s255, 1
      $region28: #{dice_bpm.1} parent=15 // pred_fallthru
        _
    $region16: #{dice_bpm.1} parent=5 // pred_fallthru
      _
    %p258 = scmp.le.s32.totalorder 1, %s11
    %p259 = scmp.lt.s32.totalorder %s11, 3
    %p260 = pnand %p258, %p259
    %p261 = pneg %p260
    // Predicated region
    $region29: #{dice_bpm.1} parent=5 // pred_check
      _
    $region30: #{dice_bpm.1} parent=5 // pred_check_branch
      %263 = sbr.rel (%p260) target = $region32
    $region31: #{dice_bpm.1} parent=5 // pred_region
      %s264 = ssub.s32 %s11, 1
      %s265 = sadd.s32 %s21, %s23
      %p266 = scmp.lt.s32.totalorder %s265, 1
      %s267 = scalar_select %p266, %s265, 1
      %p268 = scmp.lt.s32.totalorder %s22, 0
      %s269 = scalar_select %p268, %s22, 0
      %p270 = scmp.lt.s32.totalorder %s267, 1
      %s271 = scalar_select %p270, %s267, 1
      %s272 = smul.addr %s269, 2
      %s273 = sadd.s32 %s271, %s272
      %s274 = smul.addr %s273, 8
      %s275 = scalar_lea.vmem %s0, %s274
      %p276 = pneg %p64
      %p277 = pneg %p61
      %s278 = sadd.s32 %s21, %s23
      %p279 = scmp.lt.s32.totalorder %s278, 1
      %s280 = scalar_select %p279, %s278, 1
      %p281 = scmp.lt.s32.totalorder %s22, 0
      %s282 = scalar_select %p281, %s22, 0
      %p283 = scmp.lt.s32.totalorder %s280, 1
      %s284 = scalar_select %p283, %s280, 1
      %s285 = smul.addr %s282, 2
      %s286 = sadd.s32 %s284, %s285
      %s287 = smul.addr %s286, 8
      %s288 = scalar_lea.vmem %s1, %s287
      %p289 = pneg %p98
      %p290 = pneg %p95
      %s291 = sadd.s32 %s21, %s23
      %p292 = scmp.lt.s32.totalorder %s291, 1
      %s293 = scalar_select %p292, %s291, 1
      %p294 = scmp.lt.s32.totalorder %s22, 0
      %s295 = scalar_select %p294, %s22, 0
      %p296 = scmp.lt.s32.totalorder %s293, 1
      %s297 = scalar_select %p296, %s293, 1
      %s298 = smul.addr %s295, 2
      %s299 = sadd.s32 %s297, %s298
      %s300 = smul.addr %s299, 8
      %s301 = scalar_lea.vmem %s2, %s300
      %p302 = pneg %p132
      %p303 = pneg %p129
      %p304 = pneg %p160
      %p305 = pneg %p157
      %p306 = scmp.lt.s32.totalorder %s21, 1
      %s307 = scalar_select %p306, %s21, 1
      %p308 = scmp.lt.s32.totalorder %s22, 0
      %s309 = scalar_select %p308, %s22, 0
      %s310 = sadd.s32 %s309, %s307
      %s311 = smul.addr %s310, 8
      %s312 = scalar_lea.vmem %s3, %s311
      %p313 = pneg %p188
      %p314 = pneg %p185
      %p315 = scmp.lt.s32.totalorder %s21, 1
      %s316 = scalar_select %p315, %s21, 1
      %p317 = scmp.lt.s32.totalorder %s22, 0
      %s318 = scalar_select %p317, %s22, 0
      %s319 = sadd.s32 %s318, %s316
      %s320 = smul.addr %s319, 8
      %s321 = scalar_lea.vmem %s4, %s320
      %s322 = sadd.s32 %s21, %s23
      %p323 = scmp.lt.s32.totalorder %s322, 1
      %s324 = scalar_select %p323, %s322, 1
      %p325 = scmp.lt.s32.totalorder %s22, 0
      %s326 = scalar_select %p325, %s22, 0
      %p327 = scmp.lt.s32.totalorder %s324, 1
      %s328 = scalar_select %p327, %s324, 1
      %s329 = smul.addr %s326, 2
      %s330 = sadd.s32 %s328, %s329
      %s331 = smul.addr %s330, 8
      %s332 = scalar_lea.vmem %s0, %s331
      %s333 = sadd.s32 %s21, %s23
      %p334 = scmp.lt.s32.totalorder %s333, 1
      %s335 = scalar_select %p334, %s333, 1
      %s336 = sadd.s32 %s21, %s23
      %p337 = scmp.lt.s32.totalorder %s336, 1
      %s338 = scalar_select %p337, %s336, 1
      %p339 = scmp.lt.s32.totalorder %s22, 0
      %s340 = scalar_select %p339, %s22, 0
      %p341 = scmp.lt.s32.totalorder %s338, 1
      %s342 = scalar_select %p341, %s338, 1
      %s343 = smul.addr %s340, 2
      %s344 = sadd.s32 %s342, %s343
      %s345 = smul.addr %s344, 8
      %s346 = scalar_lea.vmem %s1, %s345
      %s347 = sadd.s32 %s21, %s23
      %p348 = scmp.lt.s32.totalorder %s347, 1
      %s349 = scalar_select %p348, %s347, 1
      %s350 = sadd.s32 %s21, %s23
      %p351 = scmp.lt.s32.totalorder %s350, 1
      %s352 = scalar_select %p351, %s350, 1
      %p353 = scmp.lt.s32.totalorder %s22, 0
      %s354 = scalar_select %p353, %s22, 0
      %p355 = scmp.lt.s32.totalorder %s352, 1
      %s356 = scalar_select %p355, %s352, 1
      %s357 = smul.addr %s354, 2
      %s358 = sadd.s32 %s356, %s357
      %s359 = smul.addr %s358, 8
      %s360 = scalar_lea.vmem %s2, %s359
      %s361 = sadd.s32 %s21, %s23
      %p362 = scmp.lt.s32.totalorder %s361, 1
      %s363 = scalar_select %p362, %s361, 1
      %p364 = scmp.lt.s32.totalorder %s21, 1
      %s365 = scalar_select %p364, %s21, 1
      %p366 = scmp.lt.s32.totalorder %s22, 0
      %s367 = scalar_select %p366, %s22, 0
      %s368 = sadd.s32 %s367, %s365
      %s369 = smul.addr %s368, 8
      %s370 = scalar_lea.vmem %s3, %s369
      %p371 = scmp.lt.s32.totalorder %s21, 1
      %s372 = scalar_select %p371, %s21, 1
      %p373 = scmp.lt.s32.totalorder %s22, 0
      %s374 = scalar_select %p373, %s22, 0
      %s375 = sadd.s32 %s374, %s372
      %s376 = smul.addr %s375, 8
      %s377 = scalar_lea.vmem %s4, %s376
      %p378 = scmp.eq.s32.totalorder %s23, 0
      // Predicated region
      $region33: #{dice_bpm.1} parent=31 // pred_check
        %p379 = pneg %p378
      $region34: #{dice_bpm.1} parent=31 // pred_check_branch
        %381 = sbr.rel (%p379) target = $region36
      $region35: #{dice_bpm.1} parent=31 // pred_region
        %382 = vst [vmem:[%s370] sm:$0xff] 0.0
        %383 = vst [vmem:[%s377] sm:$0xff] 0.0
      $region36: #{dice_bpm.1} parent=31 // pred_fallthru
        _
      %s384 = sadd.s32 %s21, %s23
      %p385 = scmp.lt.s32.totalorder %s384, 2
      // Predicated region
      $region37: #{dice_bpm.1} parent=31 // pred_check
        %p386 = pneg %p385
      $region38: #{dice_bpm.1} parent=31 // pred_check_branch
        %388 = sbr.rel (%p386) target = $region40
      $region39: #{dice_bpm.1} parent=31 // pred_region
        %v389 = vld [vmem:[%s332] sm:$0xff]
        %v390 = vld [vmem:[%s346] sm:$0xff]
        %v391 = vld [vmem:[%s360] sm:$0xff]
        %v392 = vmul.f32 %v390, %v389
        %v393 = vmul.f32 %v392, %v391
        %v394 = vadd.f32 %v393, 0.0
        %v395 = vadd.f32 %v390, %v389
        %v396 = vmul.f32 %v395, %v391
        %v397 = vadd.f32 %v396, 0.0
        %v398 = vld [vmem:[%s370] sm:$0xff]
        %v399 = vadd.f32 %v398, %v394
        %400 = vst [vmem:[%s370] sm:$0xff] %v399
        %v401 = vld [vmem:[%s377] sm:$0xff]
        %v402 = vadd.f32 %v401, %v397
        %403 = vst [vmem:[%s377] sm:$0xff] %v402
      $region40: #{dice_bpm.1} parent=31 // pred_fallthru
        _
      %p404 = scmp.lt.s32.totalorder %s21, 1
      %s405 = scalar_select %p404, %s21, 1
      %p406 = scmp.lt.s32.totalorder %s22, 0
      %s407 = scalar_select %p406, %s22, 0
      %s408 = sadd.s32 %s407, %s405
      %s409 = smul.addr %s408, 8
      %s410 = scalar_lea.vmem %s3, %s409
      %p411 = scmp.lt.s32.totalorder %s21, 1
      %s412 = scalar_select %p411, %s21, 1
      %p413 = scmp.lt.s32.totalorder %s22, 0
      %s414 = scalar_select %p413, %s22, 0
      %s415 = sadd.s32 %s414, %s412
      %s416 = smul.addr %s415, 8
      %s417 = scalar_lea.vmem %s4, %s416
      // Predicated region
      $region41: #{dice_bpm.1} parent=31 // pred_check
        %p418 = pneg %p157
      $region42: #{dice_bpm.1} parent=31 // pred_check_branch
        %420 = sbr.rel (%p418) target = $region44
      $region43: #{dice_bpm.1} parent=31 // pred_region
        _
      $region44: #{dice_bpm.1} parent=31 // pred_fallthru
        _
      // Predicated region
      $region45: #{dice_bpm.1} parent=31 // pred_check
        %p421 = pneg %p185
      $region46: #{dice_bpm.1} parent=31 // pred_check_branch
        %423 = sbr.rel (%p421) target = $region48
      $region47: #{dice_bpm.1} parent=31 // pred_region
        _
      $region48: #{dice_bpm.1} parent=31 // pred_fallthru
        _
    $region32: #{dice_bpm.1} parent=5 // pred_fallthru
      _
    %p424 = scmp.le.s32.totalorder 2, %s11
    // Predicated region
    $region49: #{dice_bpm.1} parent=5 // pred_check
      %p425 = pneg %p424
    $region50: #{dice_bpm.1} parent=5 // pred_check_branch
      %427 = sbr.rel (%p425) target = $region52
    $region51: #{dice_bpm.1} parent=5 // pred_region
      %s428 = ssub.s32 %s11, 2
      // Predicated region
      $region53: #{dice_bpm.1} parent=51 // pred_check
        %p429 = pneg %p163
      $region54: #{dice_bpm.1} parent=51 // pred_check_branch
        %431 = sbr.rel (%p429) target = $region56
      $region55: #{dice_bpm.1} parent=51 // pred_region
        %p432 = scmp.lt.s32.totalorder %s24, 1
        %s433 = scalar_select %p432, %s24, 1
        %p434 = scmp.lt.s32.totalorder %s25, 0
        %s435 = scalar_select %p434, %s25, 0
        %s436 = sadd.s32 %s435, %s433
        %s437 = smul.addr %s436, 8
        %s438 = scalar_lea.vmem %s3, %s437
      $region56: #{dice_bpm.1} parent=51 // pred_fallthru
        _
      // Predicated region
      $region57: #{dice_bpm.1} parent=51 // pred_check
        %p439 = pneg %p191
      $region58: #{dice_bpm.1} parent=51 // pred_check_branch
        %441 = sbr.rel (%p439) target = $region60
      $region59: #{dice_bpm.1} parent=51 // pred_region
        %p442 = scmp.lt.s32.totalorder %s24, 1
        %s443 = scalar_select %p442, %s24, 1
        %p444 = scmp.lt.s32.totalorder %s25, 0
        %s445 = scalar_select %p444, %s25, 0
        %s446 = sadd.s32 %s445, %s443
        %s447 = smul.addr %s446, 8
        %s448 = scalar_lea.vmem %s4, %s447
      $region60: #{dice_bpm.1} parent=51 // pred_fallthru
        _
    $region52: #{dice_bpm.1} parent=5 // pred_fallthru
      _
  $region6: #{dice_bpm.1} parent=0 // loop_footer
    %s15 = sadd.s32 1, %s11
  $region7: #{dice_bpm.1} parent=0 // loop_footer_branch
    %10 = sbr.rel target = $region3
  $region8: #{dice_bpm.1} parent=0 // loop_exit
    _

</llo_original>
